<compile_context>
chip_gen: v7x
topology: tpu7x:2x2x1
jax: 0.10.0
libtpu: 0.0.40
codegen_flags: <defaults>
</compile_context>

<pallas_src>
import jax
import jax.numpy as jnp
from jax.experimental import pallas as pl
from jax.experimental.pallas import tpu as pltpu


def _se_gate_kernel(gate_ref, x_ref, o_ref):
    # gate_ref: (tc, 1); x_ref / o_ref: (tc, hw). Broadcast multiply in f32.
    g = jax.nn.sigmoid(gate_ref[...].astype(jnp.float32))
    o_ref[...] = (g * x_ref[...].astype(jnp.float32)).astype(o_ref.dtype)


def _round_up(x, m):
    return -(-x // m) * m


def _has_two_tensorcores():
    """Best-effort detection of a 2-TensorCore-per-chip part (v7x)."""
    try:
        kind = jax.devices()[0].device_kind.lower()
    except Exception:
        return False
    # v5e / v6e are single-TC; v7x exposes 2 TCs per chip.
    return "7" in kind


def _choose_tc(rows, hw, itemsize, *, prefer_multicore, max_block_bytes=4 << 20):
    """Pick a channel-tile size (rows of the (rows, hw) slab per grid step).

    Candidates: divisors of `rows` that are multiples of the dtype-aware
    sublane alignment, plus `rows` itself (a full-extent block is always
    legal). Prefer the largest tile within the per-block byte budget; on
    2-TC parts prefer an even number of grid steps so both cores get equal
    work; on 1-TC parts take the single largest block (fewest steps).
    """
    align = max(8, 32 // max(itemsize, 1))  # 8 (f32), 16 (bf16), 32 (int8/fp8)
    candidates = {rows}
    candidates.update(d for d in range(align, rows, align) if rows % d == 0)
    candidates = sorted(candidates, reverse=True)
    fits = [c for c in candidates if c * hw * itemsize <= max_block_bytes]
    if not fits:
        # No aligned divisor fits the budget; fall back to the smallest tile.
        fits = [min(candidates)]
    if prefer_multicore:
        even_steps = [c for c in fits if (rows // c) >= 2 and (rows // c) % 2 == 0]
        if even_steps:
            return even_steps[0]
        multi_steps = [c for c in fits if rows // c >= 2]
        if multi_steps:
            return multi_steps[0]
    return fits[0]


def sigmoid_mul(gate_nchw, x_nchw, *, tc=None):
    """Computes sigmoid(gate) * x with NCHW inputs, gate shaped (N, C, 1, 1)."""
    N, C, H, W = x_nchw.shape
    assert gate_nchw.shape == (N, C, 1, 1)

    rows = N * C
    hw = H * W
    x2d = x_nchw.reshape(rows, hw)
    g2d = gate_nchw.reshape(rows, 1)

    itemsize = x2d.dtype.itemsize
    align = max(8, 32 // max(itemsize, 1))
    if tc is None:
        tc = _choose_tc(rows, hw, itemsize,
                        prefer_multicore=_has_two_tensorcores())
    assert rows % tc == 0
    assert tc == rows or tc % align == 0, "channel tile must be sublane-aligned"
    grid = (rows // tc,)

    # Derive the VMEM limit from the actual padded double-buffered footprint:
    # 2 buffers each for the x tile, the output tile, and the (tc, 1) gate.
    tc_pad = _round_up(tc, align)
    hw_pad = _round_up(hw, 128)
    block_bytes_pad = tc_pad * hw_pad * itemsize
    gate_bytes_pad = tc_pad * 128 * g2d.dtype.itemsize
    footprint = 2 * (2 * block_bytes_pad + gate_bytes_pad)
    vmem_limit = int(min(max(footprint * 3 // 2, 16 << 20), 48 << 20))

    cost = pl.CostEstimate(
        flops=rows * hw,                         # one multiply per element
        transcendentals=rows,                    # one sigmoid per (n, c) row
        bytes_accessed=2 * rows * hw * itemsize  # x in + out
        + rows * g2d.dtype.itemsize,             # gate in
    )

    out2d = pl.pallas_call(
        _se_gate_kernel,
        out_shape=jax.ShapeDtypeStruct((rows, hw), x2d.dtype),
        grid_spec=pltpu.PrefetchScalarGridSpec(
            num_scalar_prefetch=0,
            grid=grid,
            in_specs=[
                # Per-step gate column: tiny DMA, no in-kernel slicing needed.
                pl.BlockSpec((tc, 1), lambda i: (i, 0)),
                # x tile: one (tc, hw) slab per step.
                pl.BlockSpec((tc, hw), lambda i: (i, 0)),
            ],
            out_specs=pl.BlockSpec((tc, hw), lambda i: (i, 0)),
        ),
        compiler_params=pltpu.CompilerParams(
            dimension_semantics=("parallel",),
            vmem_limit_bytes=vmem_limit,
        ),
        cost_estimate=cost,
    )(g2d, x2d)

    return out2d.reshape(N, C, H, W)


if __name__ == "__main__":
    # Small shapes consistent with the module ([N, C, H, W] feature map and a
    # [N, C, 1, 1] per-channel gate). Reference module used [1, 1344, 14, 14];
    # here a small batch>1 case also exercises the batch folding and the
    # tile-selection logic (rows = N*C = 32).
    N, C, H, W = 2, 16, 14, 14

    key = jax.random.PRNGKey(0)
    k1, k2 = jax.random.split(key)
    x407 = jax.random.normal(k1, (N, C, H, W), dtype=jnp.float32)
    x411 = jax.random.normal(k2, (N, C, 1, 1), dtype=jnp.float32)

    out = sigmoid_mul(x411, x407)
    out = jax.block_until_ready(out)

    # Sanity check against plain JAX reference.
    ref = jax.nn.sigmoid(x411) * x407
    assert out.shape == ref.shape
    assert jnp.allclose(out, ref, atol=1e-6, rtol=1e-6)

    print("KERNEL_OK")
</pallas_src>

<mosaic_0001>
module attributes {stable_mosaic.version = 11 : i64} {
  func.func @_se_gate_kernel(%arg0: i32, %arg1: memref<32x1xf32, #tpu.memory_space<vmem>>, %arg2: memref<32x196xf32, #tpu.memory_space<vmem>>, %arg3: memref<32x196xf32, #tpu.memory_space<vmem>>) attributes {dimension_semantics = [#tpu.dimension_semantics<parallel>], iteration_bounds = array<i64: 1>, scalar_prefetch = 0 : i64, scratch_operands = 0 : i64, tpu.core_type = #tpu.core_type<tc>, window_params = [{transform_indices = @transform_0, window_bounds = array<i64: 32, 1>}, {transform_indices = @transform_1, window_bounds = array<i64: 32, 196>}, {transform_indices = @transform_2, window_bounds = array<i64: 32, 196>}]} {
    %c0 = arith.constant 0 : index
    %c0_0 = arith.constant 0 : index
    %0 = vector.load %arg1[%c0, %c0_0] : memref<32x1xf32, #tpu.memory_space<vmem>>, vector<32x1xf32>
    %1 = arith.negf %0 : vector<32x1xf32>
    %2 = math.exp %1 : vector<32x1xf32>
    %cst = arith.constant 1.000000e+00 : f32
    %3 = vector.broadcast %cst : f32 to vector<32x1xf32>
    %4 = arith.addf %3, %2 : vector<32x1xf32>
    %5 = arith.divf %3, %4 : vector<32x1xf32>
    %c0_1 = arith.constant 0 : index
    %c0_2 = arith.constant 0 : index
    %6 = vector.load %arg2[%c0_1, %c0_2] : memref<32x196xf32, #tpu.memory_space<vmem>>, vector<32x196xf32>
    %7 = vector.broadcast %5 : vector<32x1xf32> to vector<32x196xf32>
    %8 = arith.mulf %7, %6 : vector<32x196xf32>
    %c0_3 = arith.constant 0 : index
    %c0_4 = arith.constant 0 : index
    %9 = vector.load %arg3[%c0_3, %c0_4] : memref<32x196xf32, #tpu.memory_space<vmem>>, vector<32x196xf32>
    tpu.vector_store %arg3[%c0_3, %c0_4], %8 {strides = array<i32>} : memref<32x196xf32, #tpu.memory_space<vmem>>, vector<32x196xf32>,
    return
  }
  func.func @transform_0(%arg0: i32) -> (i32, i32) {
    %c0_i32 = arith.constant 0 : i32
    %c0_i32_0 = arith.constant 0 : i32
    return %arg0, %c0_i32 : i32, i32
  }
  func.func @transform_1(%arg0: i32) -> (i32, i32) {
    %c0_i32 = arith.constant 0 : i32
    %c0_i32_0 = arith.constant 0 : i32
    return %arg0, %c0_i32 : i32, i32
  }
  func.func @transform_2(%arg0: i32) -> (i32, i32) {
    %c0_i32 = arith.constant 0 : i32
    %c0_i32_0 = arith.constant 0 : i32
    return %arg0, %c0_i32 : i32, i32
  }
}

</mosaic_0001>

<llo_original>
// kernel: tpu_custom_call.1
$region0: #{tpu_custom_call.1}
  #allocation0 [shape = 'u32[]', space=smem, size = 0x4, offset = 0x4, fixed_abs, tag = 'smem constant byte address 0x4 - core index']
  #allocation1 [shape = 'u32[144,128]{1,0:T(1,128)}', space=vmem, size = 0x12000, scoped, tag = 'internal scratch']
  %s0 = inlined_call_operand.vmem [shape: f32[32,1], index: 0, kind: input, shape index: {}]
  %s1 = inlined_call_operand.hbm [shape: f32[32,196], index: 1, kind: input, shape index: {}]
  %s2 = inlined_call_operand.hbm [shape: f32[32,196], index: 2, kind: output, shape index: {}]
  %s3 = sld [smem:[#allocation0]]
  $region22: #{tpu_custom_call.1} parent=0
    _
  %s5 = ssub.s32 1, %s3
  %s6 = scalar_select 0, %s5, %s3
  $region1: #{tpu_custom_call.1} parent=0
    #allocation2 [shape = 'u8[32768]{0}', space=vmem, size = 0x8000, scoped, tag = 'input window, operand 1, single buffered']
    #allocation3 [shape = 's32[1]{0}', space=sflag, size = 0x4, scoped, tag = 'scoped memory for tpu_custom_call.1']
    #allocation4 [shape = 's32[1]{0}', space=sflag, size = 0x4, scoped, tag = 'scoped memory for tpu_custom_call.1']
    #allocation5 [shape = 'u8[32768]{0}', space=vmem, size = 0x8000, scoped, tag = 'output window, operand 0, single buffered']
    %7 = vsyncpa [#allocation3], 0
    %8 = vsyncpa [#allocation4], 0
    // Predicated region
    $region2: #{tpu_custom_call.1} parent=1 // pred_check
      _
    $region3: #{tpu_custom_call.1} parent=1 // pred_check_branch
      %10 = sbr.rel (0) target = $region5
    $region4: #{tpu_custom_call.1} parent=1 // pred_region
      _
    $region5: #{tpu_custom_call.1} parent=1 // pred_fallthru
      _
    // Predicated region
    $region6: #{tpu_custom_call.1} parent=1 // pred_check
      _
    $region7: #{tpu_custom_call.1} parent=1 // pred_check_branch
      %12 = sbr.rel (0) target = $region9
    $region8: #{tpu_custom_call.1} parent=1 // pred_region
      %s14 = ssub.s32 1024, 1024
      %15 = vsyncadd [#allocation3], %s14
      %s16 = sshll.u32 [#allocation2], 4
      %s17 = int_to_ptr.vmem [resolvable:$true] %s16
      %22 = dma.hbm_to_vmem [thread:$0]  %s1, 1024, %s17, [#allocation3], 256, 256, 16
    $region9: #{tpu_custom_call.1} parent=1 // pred_fallthru
      _
    // Predicated region
    $region10: #{tpu_custom_call.1} parent=1 // pred_check
      _
    $region11: #{tpu_custom_call.1} parent=1 // pred_check_branch
      %24 = sbr.rel (0) target = $region13
    $region12: #{tpu_custom_call.1} parent=1 // pred_region
      %25 = dma.done [#allocation3], 1024
    $region13: #{tpu_custom_call.1} parent=1 // pred_fallthru
      _
    %v26 = vld [vmem:[%s0] sm:$0xff]
    %v27 = vld [vmem:[%s0 + $0x8] sm:$0xff]
    %v28 = vld [vmem:[%s0 + $0x10] sm:$0xff]
    %v29 = vld [vmem:[%s0 + $0x18] sm:$0xff]
    %v30 = vxor.u32 %v26, 2147483648
    %v31 = vxor.u32 %v27, 2147483648
    %v32 = vxor.u32 %v28, 2147483648
    %v33 = vxor.u32 %v29, 2147483648
    %v34 = vmul.f32 %v30, 1.442695
    %v35 = vpow.pop %v34
    %v36 = vmul.f32 %v31, 1.442695
    %v37 = vpow.pop %v36
    %v38 = vmul.f32 %v32, 1.442695
    %v39 = vpow.pop %v38
    %v40 = vmul.f32 %v33, 1.442695
    %v41 = vpow.pop %v40
    %v42 = vadd.f32 %v35, 1.0
    %v43 = vadd.f32 %v37, 1.0
    %v44 = vadd.f32 %v39, 1.0
    %v45 = vadd.f32 %v41, 1.0
    %v46 = vrcp.pop %v42
    %v47 = vmul.f32 1.0, %v46
    %v48 = vrcp.pop %v43
    %v49 = vmul.f32 1.0, %v48
    %v50 = vrcp.pop %v44
    %v51 = vmul.f32 1.0, %v50
    %v52 = vrcp.pop %v45
    %v53 = vmul.f32 1.0, %v52
    %v54 = vld [vmem:[#allocation2] sm:$0xff]
    %v55 = vld [vmem:[#allocation2 + $0x8] sm:$0xff]
    %v56 = vld [vmem:[#allocation2 + $0x10] sm:$0xff]
    %v57 = vld [vmem:[#allocation2 + $0x18] sm:$0xff]
    %v58 = vld [vmem:[#allocation2 + $0x20] sm:$0xff]
    %v59 = vld [vmem:[#allocation2 + $0x28] sm:$0xff]
    %v60 = vld [vmem:[#allocation2 + $0x30] sm:$0xff]
    %v61 = vld [vmem:[#allocation2 + $0x38] sm:$0xff]
    %63 = vset.pattern.permute.xlu0 0
    %64 = vperm.xlu0 %63, %v47
    %v65 = vpop.permute.xlu0 %64
    %68 = vset.pattern.permute.xlu0 0
    %69 = vperm.xlu0 %68, %v49
    %v70 = vpop.permute.xlu0 %69
    %73 = vset.pattern.permute.xlu0 0
    %74 = vperm.xlu0 %73, %v51
    %v75 = vpop.permute.xlu0 %74
    %78 = vset.pattern.permute.xlu0 0
    %79 = vperm.xlu0 %78, %v53
    %v80 = vpop.permute.xlu0 %79
    %v82 = vmul.f32 %v65, %v54
    %v83 = vmul.f32 %v65, %v55
    %v84 = vmul.f32 %v70, %v56
    %v85 = vmul.f32 %v70, %v57
    %v86 = vmul.f32 %v75, %v58
    %v87 = vmul.f32 %v75, %v59
    %v88 = vmul.f32 %v80, %v60
    %v89 = vmul.f32 %v80, %v61
    %90 = vst [vmem:[#allocation5] sm:$0xff] %v82
    %vm91 = vcmask 556032
    %92 = vst.msk [vmem:[#allocation5 + $0x8] sm:$0xff] %vm91, %v83
    %93 = vst [vmem:[#allocation5 + $0x10] sm:$0xff] %v84
    %94 = vst.msk [vmem:[#allocation5 + $0x18] sm:$0xff] %vm91, %v85
    %95 = vst [vmem:[#allocation5 + $0x20] sm:$0xff] %v86
    %96 = vst.msk [vmem:[#allocation5 + $0x28] sm:$0xff] %vm91, %v87
    %97 = vst [vmem:[#allocation5 + $0x30] sm:$0xff] %v88
    %98 = vst.msk [vmem:[#allocation5 + $0x38] sm:$0xff] %vm91, %v89
    // Predicated region
    $region14: #{tpu_custom_call.1} parent=1 // pred_check
      _
    $region15: #{tpu_custom_call.1} parent=1 // pred_check_branch
      %100 = sbr.rel (0) target = $region17
    $region16: #{tpu_custom_call.1} parent=1 // pred_region
      %s102 = ssub.s32 1024, 1024
      %103 = vsyncadd [#allocation4], %s102
      %s104 = sshll.u32 [#allocation5], 4
      %s105 = int_to_ptr.vmem [resolvable:$true] %s104
      %110 = dma.vmem_to_hbm [thread:$0]  %s105, 1024, %s2, [#allocation4], 256, 256, 16
    $region17: #{tpu_custom_call.1} parent=1 // pred_fallthru
      _
    // Predicated region
    $region18: #{tpu_custom_call.1} parent=1 // pred_check
      _
    $region19: #{tpu_custom_call.1} parent=1 // pred_check_branch
      %112 = sbr.rel (0) target = $region21
    $region20: #{tpu_custom_call.1} parent=1 // pred_region
      %113 = dma.done [#allocation4], 1024
    $region21: #{tpu_custom_call.1} parent=1 // pred_fallthru
      _
    %114 = vsyncpa [#allocation3], 1
    %115 = vsyncpa [#allocation4], 1

</llo_original>
